<compile_context>
chip_gen: v7x
topology: tpu7x:2x2x1
jax: 0.10.0
libtpu: 0.0.40
codegen_flags: <defaults>
</compile_context>

<pallas_src>
import functools

import jax
import jax.numpy as jnp
from jax import lax
from jax.experimental import pallas as pl
from jax.experimental.pallas import tpu as pltpu

EPS = 1e-5  # torch nn.LayerNorm default


# ----------------------------------------------------------------------------
# in-kernel math helpers (pure jnp, traced inside the kernels)
# ----------------------------------------------------------------------------
def _layernorm(x, w, b):
    mu = jnp.mean(x, axis=-1, keepdims=True)
    var = jnp.mean((x - mu) ** 2, axis=-1, keepdims=True)
    return (x - mu) * lax.rsqrt(var + EPS) * w + b


def _erf(x):
    # Abramowitz & Stegun 7.1.26 rational approximation (|err| < 1.5e-7);
    # division replaced by EUP approx reciprocal.
    a1, a2, a3, a4, a5 = 0.254829592, -0.284496736, 1.421413741, -1.453152027, 1.061405429
    p = 0.3275911
    s = jnp.where(x >= 0.0, 1.0, -1.0)
    ax = jnp.abs(x)
    t = pl.reciprocal(1.0 + p * ax, approx=True)
    poly = ((((a5 * t + a4) * t + a3) * t + a2) * t + a1) * t
    return s * (1.0 - poly * jnp.exp(-ax * ax))


def _gelu_exact(x):
    # matches torch nn.GELU() (exact erf form) up to ~1e-6
    return 0.5 * x * (1.0 + _erf(x * 0.7071067811865476))


def _pick_tb(B, max_tb=4):
    # largest divisor of B that is <= max_tb (bounds VMEM + unrolled code size)
    for tb in range(min(B, max_tb), 0, -1):
        if B % tb == 0:
            return tb
    return 1


# ----------------------------------------------------------------------------
# Kernel 1: patch embedding (conv-as-matmul per batch element) + bias + pos
# ----------------------------------------------------------------------------
def patch_embed_kernel(p_ref, w_ref, b_ref, pos_ref, o_ref):
    # p_ref: (N, P) bf16   w_ref: (P, D) bf16   b_ref: (1, D) f32   pos_ref: (N, D) f32
    o_ref[...] = (
        jnp.dot(p_ref[...], w_ref[...], preferred_element_type=jnp.float32)
        + b_ref[...]
        + pos_ref[...]
    )


def patch_embed(patches, w, b, pos):
    # patches: (B, N, P)   w: (P, D)   b: (1, D)   pos: (1, N, D)
    B, N, P = patches.shape
    D = w.shape[1]
    return pl.pallas_call(
        patch_embed_kernel,
        out_shape=jax.ShapeDtypeStruct((B, N, D), jnp.float32),
        grid=(B,),
        in_specs=[
            pl.BlockSpec((None, N, P), lambda b: (b, 0, 0)),
            pl.BlockSpec((P, D), lambda b: (0, 0)),
            pl.BlockSpec((1, D), lambda b: (0, 0)),
            pl.BlockSpec((None, N, D), lambda b: (0, 0, 0)),
        ],
        out_specs=pl.BlockSpec((None, N, D), lambda b: (b, 0, 0)),
        compiler_params=pltpu.CompilerParams(dimension_semantics=("parallel",)),
    )(patches.astype(jnp.bfloat16), w.astype(jnp.bfloat16), b, pos)


# ----------------------------------------------------------------------------
# Kernel 2: ALL Layer_scale_init_Blocks fused (grid = (batch_tile, layer))
#   LN -> MHSA -> LayerScale residual, LN -> MLP -> LayerScale residual.
#   The (TB, S, D) residual stream stays resident in the output VMEM block
#   across the layer axis; per-layer weights are pipelined through BlockSpecs.
# ----------------------------------------------------------------------------
def blocks_kernel(x_ref, ln1w, ln1b, qkvw, projw, projb,
                  ln2w, ln2b, fc1w, fc1b, fc2w, fc2b, g1, g2,
                  o_ref, *, num_heads, scale, tb):
    l = pl.program_id(1)

    @pl.when(l == 0)
    def _():
        o_ref[...] = x_ref[...]

    D = o_ref.shape[-1]
    hd = D // num_heads

    # hoist weight tile loads out of the per-sample loop
    ln1w_v, ln1b_v = ln1w[...], ln1b[...]
    qkvw_v = qkvw[...]
    projw_v = projw[...]
    projb_v = projb[...]
    ln2w_v, ln2b_v = ln2w[...], ln2b[...]
    fc1w_v, fc1b_v = fc1w[...], fc1b[...]
    fc2w_v, fc2b_v = fc2w[...], fc2b[...]
    g1_v, g2_v = g1[...], g2[...]

    for bi in range(tb):                                 # static unroll over batch tile
        x = o_ref[bi]                                    # (S, D) f32 residual stream
        S = x.shape[0]

        # ---------------- attention branch ----------------
        h = _layernorm(x, ln1w_v, ln1b_v)
        qkv = jnp.dot(h.astype(jnp.bfloat16), qkvw_v,
                      preferred_element_type=jnp.float32)        # (S, 3D) f32
        q = qkv[:, 0:D] * scale
        k = qkv[:, D:2 * D]
        v = qkv[:, 2 * D:3 * D]

        # per-head attention with output projection folded into the accumulator
        attn_proj = jnp.zeros((S, D), jnp.float32)
        for hh in range(num_heads):                      # static unroll over heads
            sl = slice(hh * hd, (hh + 1) * hd)
            qh = q[:, sl].astype(jnp.bfloat16)
            kh = k[:, sl].astype(jnp.bfloat16)
            vh = v[:, sl].astype(jnp.bfloat16)
            # q @ k^T via dot_general contraction on the head dim (no explicit .T)
            a = lax.dot_general(qh, kh, (((1,), (1,)), ((), ())),
                                preferred_element_type=jnp.float32)  # (S, S) f32
            a = a - jnp.max(a, axis=-1, keepdims=True)
            a = jnp.exp(a)
            a = a * pl.reciprocal(jnp.sum(a, axis=-1, keepdims=True), approx=True)
            oh = jnp.dot(a.astype(jnp.bfloat16), vh,
                         preferred_element_type=jnp.float32)         # (S, hd)
            attn_proj = attn_proj + jnp.dot(oh.astype(jnp.bfloat16), projw_v[sl, :],
                                            preferred_element_type=jnp.float32)
        x = x + g1_v * (attn_proj + projb_v)

        # ---------------- MLP branch ----------------
        h2 = _layernorm(x, ln2w_v, ln2b_v)
        h2 = jnp.dot(h2.astype(jnp.bfloat16), fc1w_v,
                     preferred_element_type=jnp.float32) + fc1b_v
        h2 = _gelu_exact(h2)
        h2 = jnp.dot(h2.astype(jnp.bfloat16), fc2w_v,
                     preferred_element_type=jnp.float32) + fc2b_v
        x = x + g2_v * h2

        o_ref[bi] = x


def run_blocks(x, bw, num_heads, scale):
    B, S, D = x.shape
    L = bw["qkv_w"].shape[0]
    H = bw["fc1_w"].shape[2]
    TB = _pick_tb(B)
    kernel = functools.partial(blocks_kernel, num_heads=num_heads, scale=scale, tb=TB)

    def wspec(shape):
        nd = len(shape)
        return pl.BlockSpec((None,) + shape, lambda bb, l: (l,) + (0,) * nd)

    bf16 = lambda a: a.astype(jnp.bfloat16)

    return pl.pallas_call(
        kernel,
        out_shape=jax.ShapeDtypeStruct((B, S, D), jnp.float32),
        grid=(B // TB, L),
        in_specs=[
            pl.BlockSpec((TB, S, D), lambda bb, l: (bb, 0, 0)),   # x (only used at l==0)
            wspec((1, D)), wspec((1, D)),                         # ln1 w/b
            wspec((D, 3 * D)),                                    # qkv weight (bf16)
            wspec((D, D)), wspec((1, D)),                         # proj w (bf16) / b
            wspec((1, D)), wspec((1, D)),                         # ln2 w/b
            wspec((D, H)), wspec((1, H)),                         # fc1 w (bf16) / b
            wspec((H, D)), wspec((1, D)),                         # fc2 w (bf16) / b
            wspec((1, D)), wspec((1, D)),                         # gamma_1, gamma_2
        ],
        out_specs=pl.BlockSpec((TB, S, D), lambda bb, l: (bb, 0, 0)),
        compiler_params=pltpu.CompilerParams(
            dimension_semantics=("parallel", "arbitrary"),
            vmem_limit_bytes=64 * 1024 * 1024),
    )(x, bw["ln1_w"], bw["ln1_b"], bf16(bw["qkv_w"]),
      bf16(bw["proj_w"]), bw["proj_b"],
      bw["ln2_w"], bw["ln2_b"], bf16(bw["fc1_w"]), bw["fc1_b"],
      bf16(bw["fc2_w"]), bw["fc2_b"], bw["gamma_1"], bw["gamma_2"])


# ----------------------------------------------------------------------------
# Kernel 3: final LayerNorm (on CLS token) + classifier head
# ----------------------------------------------------------------------------
def head_kernel(x_ref, lnw, lnb, hw, hb, o_ref):
    h = _layernorm(x_ref[...], lnw[...], lnb[...])
    o_ref[...] = jnp.dot(h.astype(jnp.bfloat16), hw[...],
                         preferred_element_type=jnp.float32) + hb[...]


def run_head(x_cls, lnw, lnb, hw, hb):
    B, D = x_cls.shape
    C = hw.shape[1]
    return pl.pallas_call(
        head_kernel,
        out_shape=jax.ShapeDtypeStruct((B, C), jnp.float32),
        grid=(1,),
        in_specs=[
            pl.BlockSpec((B, D), lambda i: (0, 0)),
            pl.BlockSpec((1, D), lambda i: (0, 0)),
            pl.BlockSpec((1, D), lambda i: (0, 0)),
            pl.BlockSpec((D, C), lambda i: (0, 0)),
            pl.BlockSpec((1, C), lambda i: (0, 0)),
        ],
        out_specs=pl.BlockSpec((B, C), lambda i: (0, 0)),
    )(x_cls, lnw, lnb, hw.astype(jnp.bfloat16), hb)


# ----------------------------------------------------------------------------
# Full forward (glue: patchify, cls concat, slicing)
# ----------------------------------------------------------------------------
def vit_forward(x, params, cfg):
    B, C, Himg, Wimg = x.shape
    p = cfg["patch_size"]
    D = cfg["embed_dim"]
    Hp, Wp = Himg // p, Wimg // p
    N = Hp * Wp

    # patchify: NCHW -> (B, N, C*p*p) matching Conv2d(kernel=stride=p) + flatten
    patches = (x.reshape(B, C, Hp, p, Wp, p)
                .transpose(0, 2, 4, 1, 3, 5)
                .reshape(B, N, C * p * p))

    tok = patch_embed(patches, params["patch_w"], params["patch_b"],
                      params["pos_embed"])                      # (B, N, D) = x + pos
    cls = jnp.broadcast_to(params["cls_token"], (B, 1, D))
    xseq = jnp.concatenate([cls, tok], axis=1)                  # (B, 1+N, D)

    scale = (D // cfg["num_heads"]) ** -0.5
    xseq = run_blocks(xseq, params["blocks"], cfg["num_heads"], scale)

    x_cls = xseq[:, 0]                                          # (B, D)
    # dropout_rate = 0.0 -> no-op; DropPath(0.0) -> identity
    return run_head(x_cls, params["norm_w"], params["norm_b"],
                    params["head_w"], params["head_b"])


# ----------------------------------------------------------------------------
# Pure-JAX reference (mirrors the PyTorch forward) for a correctness check
# ----------------------------------------------------------------------------
def reference_forward(x, params, cfg):
    B, C, Himg, Wimg = x.shape
    p, D, nh = cfg["patch_size"], cfg["embed_dim"], cfg["num_heads"]
    Hp, Wp = Himg // p, Wimg // p
    N = Hp * Wp
    hd = D // nh
    scale = hd ** -0.5

    def ln(t, w, b):
        mu = jnp.mean(t, axis=-1, keepdims=True)
        var = jnp.mean((t - mu) ** 2, axis=-1, keepdims=True)
        return (t - mu) / jnp.sqrt(var + EPS) * w + b

    patches = (x.reshape(B, C, Hp, p, Wp, p)
                .transpose(0, 2, 4, 1, 3, 5)
                .reshape(B, N, C * p * p))
    tok = patches @ params["patch_w"] + params["patch_b"][0] + params["pos_embed"]
    xseq = jnp.concatenate([jnp.broadcast_to(params["cls_token"], (B, 1, D)), tok], axis=1)
    S = N + 1
    bw = params["blocks"]

    for l in range(cfg["depth"]):
        h = ln(xseq, bw["ln1_w"][l, 0], bw["ln1_b"][l, 0])
        qkv = (h @ bw["qkv_w"][l]).reshape(B, S, 3, nh, hd).transpose(2, 0, 3, 1, 4)
        q, k, v = qkv[0] * scale, qkv[1], qkv[2]
        a = jax.nn.softmax(q @ jnp.swapaxes(k, -1, -2), axis=-1)
        o = (a @ v).transpose(0, 2, 1, 3).reshape(B, S, D)
        o = o @ bw["proj_w"][l] + bw["proj_b"][l, 0]
        xseq = xseq + bw["gamma_1"][l, 0] * o

        h2 = ln(xseq, bw["ln2_w"][l, 0], bw["ln2_b"][l, 0])
        h2 = jax.nn.gelu(h2 @ bw["fc1_w"][l] + bw["fc1_b"][l, 0], approximate=False)
        h2 = h2 @ bw["fc2_w"][l] + bw["fc2_b"][l, 0]
        xseq = xseq + bw["gamma_2"][l, 0] * h2

    x_cls = ln(xseq, params["norm_w"][0], params["norm_b"][0])[:, 0]
    return x_cls @ params["head_w"] + params["head_b"][0]


# ----------------------------------------------------------------------------
# Deterministic synthetic parameter initialization (layer weights stacked on L)
# ----------------------------------------------------------------------------
def init_params(key, cfg):
    C, p, D = cfg["in_chans"], cfg["patch_size"], cfg["embed_dim"]
    N = (cfg["img_size"] // p) ** 2
    H = int(D * cfg["mlp_ratio"])
    NC = cfg["num_classes"]
    L = cfg["depth"]
    P = C * p * p
    init_scale = 1e-4

    keys = iter(jax.random.split(key, 8))

    def nrm(shape, std=0.02):
        return (std * jax.random.normal(next(keys), shape)).astype(jnp.float32)

    params = {
        "patch_w": nrm((P, D)),
        "patch_b": jnp.zeros((1, D), jnp.float32),
        "pos_embed": nrm((1, N, D)),
        "cls_token": nrm((1, 1, D)),
        "norm_w": jnp.ones((1, D), jnp.float32),
        "norm_b": jnp.zeros((1, D), jnp.float32),
        "head_w": nrm((D, NC)),
        "head_b": jnp.zeros((1, NC), jnp.float32),
        "blocks": {
            "ln1_w": jnp.ones((L, 1, D), jnp.float32),
            "ln1_b": jnp.zeros((L, 1, D), jnp.float32),
            "qkv_w": nrm((L, D, 3 * D)),                  # qkv_bias=False
            "proj_w": nrm((L, D, D)),
            "proj_b": jnp.zeros((L, 1, D), jnp.float32),
            "ln2_w": jnp.ones((L, 1, D), jnp.float32),
            "ln2_b": jnp.zeros((L, 1, D), jnp.float32),
            "fc1_w": nrm((L, D, H)),
            "fc1_b": jnp.zeros((L, 1, H), jnp.float32),
            "fc2_w": nrm((L, H, D)),
            "fc2_b": jnp.zeros((L, 1, D), jnp.float32),
            "gamma_1": init_scale * jnp.ones((L, 1, D), jnp.float32),
            "gamma_2": init_scale * jnp.ones((L, 1, D), jnp.float32),
        },
    }
    return params


if __name__ == "__main__":
    cfg = dict(img_size=16, patch_size=4, in_chans=3, num_classes=10,
               embed_dim=32, depth=2, num_heads=4, mlp_ratio=4.0)

    key = jax.random.PRNGKey(0)
    k_x, k_p = jax.random.split(key)
    x = jax.random.normal(k_x, (2, cfg["in_chans"], cfg["img_size"], cfg["img_size"]),
                          dtype=jnp.float32)
    params = init_params(k_p, cfg)

    logits = vit_forward(x, params, cfg)
    logits = jax.block_until_ready(logits)

    ref = reference_forward(x, params, cfg)
    assert logits.shape == (2, cfg["num_classes"])
    # bf16 matmul inputs + approx reciprocal -> looser tolerance than pure-f32
    assert jnp.allclose(logits, ref, rtol=2e-2, atol=2e-2), (
        f"mismatch: max abs err {jnp.max(jnp.abs(logits - ref))}")

    print("KERNEL_OK")
</pallas_src>

<mosaic_0001>
module attributes {stable_mosaic.version = 11 : i64} {
  func.func @patch_embed_kernel(%arg0: i32, %arg1: memref<1x16x48xbf16, #tpu.memory_space<vmem>>, %arg2: memref<48x32xbf16, #tpu.memory_space<vmem>>, %arg3: memref<1x32xf32, #tpu.memory_space<vmem>>, %arg4: memref<1x16x32xf32, #tpu.memory_space<vmem>>, %arg5: memref<1x16x32xf32, #tpu.memory_space<vmem>>) attributes {dimension_semantics = [#tpu.dimension_semantics<parallel>], iteration_bounds = array<i64: 2>, scalar_prefetch = 0 : i64, scratch_operands = 0 : i64, tpu.core_type = #tpu.core_type<tc>, window_params = [{transform_indices = @transform_0, window_bounds = array<i64: 1, 16, 48>}, {pipeline_mode = #tpu.pipeline_mode<synchronous>, transform_indices = @transform_1, window_bounds = array<i64: 48, 32>}, {pipeline_mode = #tpu.pipeline_mode<synchronous>, transform_indices = @transform_2, window_bounds = array<i64: 1, 32>}, {pipeline_mode = #tpu.pipeline_mode<synchronous>, transform_indices = @transform_3, window_bounds = array<i64: 1, 16, 32>}, {transform_indices = @transform_4, window_bounds = array<i64: 1, 16, 32>}]} {
    %c0 = arith.constant 0 : index
    %c0_0 = arith.constant 0 : index
    %c0_1 = arith.constant 0 : index
    %0 = vector.load %arg1[%c0, %c0_0, %c0_1] : memref<1x16x48xbf16, #tpu.memory_space<vmem>>, vector<1x16x48xbf16>
    %1 = vector.shape_cast %0 : vector<1x16x48xbf16> to vector<16x48xbf16>
    %c0_2 = arith.constant 0 : index
    %c0_3 = arith.constant 0 : index
    %2 = vector.load %arg2[%c0_2, %c0_3] : memref<48x32xbf16, #tpu.memory_space<vmem>>, vector<48x32xbf16>
    %cst = arith.constant dense<0.000000e+00> : vector<16x32xf32>
    %3 = tpu.matmul %1, %2, %cst {dimension_numbers = #tpu.dot_dimension_numbers<[1], [0], [0], [1], [0, 0, 1, 1], [], []>} : vector<16x48xbf16>, vector<48x32xbf16>, vector<16x32xf32> -> vector<16x32xf32>
    %c0_4 = arith.constant 0 : index
    %c0_5 = arith.constant 0 : index
    %4 = vector.load %arg3[%c0_4, %c0_5] : memref<1x32xf32, #tpu.memory_space<vmem>>, vector<1x32xf32>
    %5 = vector.broadcast %4 : vector<1x32xf32> to vector<16x32xf32>
    %6 = arith.addf %3, %5 : vector<16x32xf32>
    %c0_6 = arith.constant 0 : index
    %c0_7 = arith.constant 0 : index
    %c0_8 = arith.constant 0 : index
    %7 = vector.load %arg4[%c0_6, %c0_7, %c0_8] : memref<1x16x32xf32, #tpu.memory_space<vmem>>, vector<1x16x32xf32>
    %8 = vector.shape_cast %7 : vector<1x16x32xf32> to vector<16x32xf32>
    %9 = arith.addf %6, %8 : vector<16x32xf32>
    %c0_9 = arith.constant 0 : index
    %c0_10 = arith.constant 0 : index
    %c0_11 = arith.constant 0 : index
    %10 = vector.load %arg5[%c0_9, %c0_10, %c0_11] : memref<1x16x32xf32, #tpu.memory_space<vmem>>, vector<1x16x32xf32>
    %11 = vector.shape_cast %10 : vector<1x16x32xf32> to vector<16x32xf32>
    %12 = vector.shape_cast %9 : vector<16x32xf32> to vector<1x16x32xf32>
    tpu.vector_store %arg5[%c0_9, %c0_10, %c0_11], %12 {strides = array<i32>} : memref<1x16x32xf32, #tpu.memory_space<vmem>>, vector<1x16x32xf32>,
    return
  }
  func.func @transform_0(%arg0: i32) -> (i32, i32, i32) {
    %c0_i32 = arith.constant 0 : i32
    %c0_i32_0 = arith.constant 0 : i32
    %c0_i32_1 = arith.constant 0 : i32
    return %arg0, %c0_i32, %c0_i32_0 : i32, i32, i32
  }
  func.func @transform_1(%arg0: i32) -> (i32, i32) {
    %c0_i32 = arith.constant 0 : i32
    %c0_i32_0 = arith.constant 0 : i32
    %c0_i32_1 = arith.constant 0 : i32
    return %c0_i32, %c0_i32_0 : i32, i32
  }
  func.func @transform_2(%arg0: i32) -> (i32, i32) {
    %c0_i32 = arith.constant 0 : i32
    %c0_i32_0 = arith.constant 0 : i32
    %c0_i32_1 = arith.constant 0 : i32
    return %c0_i32, %c0_i32_0 : i32, i32
  }
  func.func @transform_3(%arg0: i32) -> (i32, i32, i32) {
    %c0_i32 = arith.constant 0 : i32
    %c0_i32_0 = arith.constant 0 : i32
    %c0_i32_1 = arith.constant 0 : i32
    %c0_i32_2 = arith.constant 0 : i32
    return %c0_i32, %c0_i32_0, %c0_i32_1 : i32, i32, i32
  }
  func.func @transform_4(%arg0: i32) -> (i32, i32, i32) {
    %c0_i32 = arith.constant 0 : i32
    %c0_i32_0 = arith.constant 0 : i32
    %c0_i32_1 = arith.constant 0 : i32
    return %arg0, %c0_i32, %c0_i32_0 : i32, i32, i32
  }
}

</mosaic_0001>

<llo_original>
// kernel: tpu_custom_call.1
$region0: #{tpu_custom_call.1}
  #allocation0 [shape = 'u32[]', space=smem, size = 0x4, offset = 0x4, fixed_abs, tag = 'smem constant byte address 0x4 - core index']
  #allocation1 [shape = 'u32[144,128]{1,0:T(1,128)}', space=vmem, size = 0x12000, scoped, tag = 'internal scratch']
  %s0 = inlined_call_operand.vmem [shape: bf16[2,16,48], index: 0, kind: input, shape index: {}]
  %s1 = inlined_call_operand.vmem [shape: bf16[48,32], index: 1, kind: input, shape index: {}]
  %s2 = inlined_call_operand.vmem [shape: f32[1,32], index: 2, kind: input, shape index: {}]
  %s3 = inlined_call_operand.vmem [shape: f32[1,16,32], index: 3, kind: input, shape index: {}]
  %s4 = inlined_call_operand.hbm [shape: f32[2,16,32], index: 4, kind: output, shape index: {}]
  %s5 = sld [smem:[#allocation0]]
  $region49: #{tpu_custom_call.1} parent=0
    _
  %s7 = ssub.s32 1, %s5
  %s8 = scalar_select 0, %s7, %s5
  $region1: #{tpu_custom_call.1} parent=0
    #allocation2 [shape = 'u8[16384]{0}', space=vmem, size = 0x4000, scoped, tag = 'output window, operand 0']
    #allocation3 [shape = 's32[2]{0}', space=sflag, size = 0x8, scoped, tag = 'scoped memory for tpu_custom_call.1']
    %9 = vsyncpa [#allocation3], 0
    %s10 = scalar_lea.sflag [#allocation3], 1
    %11 = vsyncpa %s10, 0
    loop: start=0, step=1, limit=4
    $region2: #{tpu_custom_call.1} parent=1 // loop_pre_header
      _
    $region3: #{tpu_custom_call.1} parent=1 // loop_header
      %s13 = sphi 0, %s17
      %p14 = scmp.ge.s32.totalorder %s13, 4
      %s23 = sphi 0, %s25
      %s26 = sphi 0, %s23
      %s27 = sphi 0, %s26
      %s43 = sphi 0, %s27
      %s47 = sphi 0, %s47
      %s49 = sphi 0, %s47
      %s50 = sphi 0, %s49
      %s64 = sphi 0, %s50
      %s68 = sphi 0, %s68
      %s70 = sphi 0, %s68
      %s71 = sphi 0, %s70
      %s85 = sphi 0, %s71
      %s89 = sphi 0, %s89
      %s91 = sphi 0, %s89
      %s92 = sphi 0, %s91
      %s106 = sphi 0, %s92
      %s112 = sphi 0, %s114
      %s115 = sphi 0, %s112
      %s116 = sphi 0, %s115
      %s132 = sphi 0, %s116
    $region4: #{tpu_custom_call.1} parent=1 // loop_header_branch
      %16 = sbr.rel (%p14) target = $region8
    $region5: #{tpu_custom_call.1} parent=1 // loop_body
      %s18 = ssub.s32 %s13, 1
      %s19 = ssub.s32 %s13, 2
      %s20 = sadd.s32 %s13, 1
      %s21 = ssub.s32 %s13, %s20
      %p22 = scmp.eq.s32.totalorder %s21, 0
      %s24 = sadd.s32 %s23, 1
      %s25 = scalar_select %p22, %s23, %s24
      %p28 = pneg %p22
      %p29 = scmp.eq.s32.totalorder %s13, 1
      %p30 = por %p28, %p29
      %p31 = scmp.ne.s32.totalorder %s23, %s26
      %p32 = scmp.eq.s32.totalorder %s13, 0
      %p33 = por %p31, %p32
      %p34 = scmp.ne.s32.totalorder %s23, %s26
      %p35 = scmp.eq.s32.totalorder %s18, 1
      %p36 = por %p34, %p35
      %p37 = scmp.ne.s32.totalorder %s26, %s27
      %p38 = scmp.eq.s32.totalorder %s18, 0
      %p39 = por %p37, %p38
      %p40 = scmp.ne.s32.totalorder %s26, %s27
      %p41 = scmp.eq.s32.totalorder %s19, 1
      %p42 = por %p40, %p41
      %p44 = scmp.ne.s32.totalorder %s27, %s43
      %p45 = scmp.eq.s32.totalorder %s19, 0
      %p46 = por %p44, %p45
      %s48 = sadd.s32 %s47, 1
      %p51 = scmp.eq.s32.totalorder %s13, 1
      %p52 = scmp.ne.s32.totalorder %s47, %s49
      %p53 = scmp.eq.s32.totalorder %s13, 0
      %p54 = por %p52, %p53
      %p55 = scmp.ne.s32.totalorder %s47, %s49
      %p56 = scmp.eq.s32.totalorder %s18, 1
      %p57 = por %p55, %p56
      %p58 = scmp.ne.s32.totalorder %s49, %s50
      %p59 = scmp.eq.s32.totalorder %s18, 0
      %p60 = por %p58, %p59
      %p61 = scmp.ne.s32.totalorder %s49, %s50
      %p62 = scmp.eq.s32.totalorder %s19, 1
      %p63 = por %p61, %p62
      %p65 = scmp.ne.s32.totalorder %s50, %s64
      %p66 = scmp.eq.s32.totalorder %s19, 0
      %p67 = por %p65, %p66
      %s69 = sadd.s32 %s68, 1
      %p72 = scmp.eq.s32.totalorder %s13, 1
      %p73 = scmp.ne.s32.totalorder %s68, %s70
      %p74 = scmp.eq.s32.totalorder %s13, 0
      %p75 = por %p73, %p74
      %p76 = scmp.ne.s32.totalorder %s68, %s70
      %p77 = scmp.eq.s32.totalorder %s18, 1
      %p78 = por %p76, %p77
      %p79 = scmp.ne.s32.totalorder %s70, %s71
      %p80 = scmp.eq.s32.totalorder %s18, 0
      %p81 = por %p79, %p80
      %p82 = scmp.ne.s32.totalorder %s70, %s71
      %p83 = scmp.eq.s32.totalorder %s19, 1
      %p84 = por %p82, %p83
      %p86 = scmp.ne.s32.totalorder %s71, %s85
      %p87 = scmp.eq.s32.totalorder %s19, 0
      %p88 = por %p86, %p87
      %s90 = sadd.s32 %s89, 1
      %p93 = scmp.eq.s32.totalorder %s13, 1
      %p94 = scmp.ne.s32.totalorder %s89, %s91
      %p95 = scmp.eq.s32.totalorder %s13, 0
      %p96 = por %p94, %p95
      %p97 = scmp.ne.s32.totalorder %s89, %s91
      %p98 = scmp.eq.s32.totalorder %s18, 1
      %p99 = por %p97, %p98
      %p100 = scmp.ne.s32.totalorder %s91, %s92
      %p101 = scmp.eq.s32.totalorder %s18, 0
      %p102 = por %p100, %p101
      %p103 = scmp.ne.s32.totalorder %s91, %s92
      %p104 = scmp.eq.s32.totalorder %s19, 1
      %p105 = por %p103, %p104
      %p107 = scmp.ne.s32.totalorder %s92, %s106
      %p108 = scmp.eq.s32.totalorder %s19, 0
      %p109 = por %p107, %p108
      %s110 = ssub.s32 %s13, %s20
      %p111 = scmp.eq.s32.totalorder %s110, 0
      %s113 = sadd.s32 %s112, 1
      %s114 = scalar_select %p111, %s112, %s113
      %p117 = pneg %p111
      %p118 = scmp.eq.s32.totalorder %s13, 1
      %p119 = por %p117, %p118
      %p120 = scmp.ne.s32.totalorder %s112, %s115
      %p121 = scmp.eq.s32.totalorder %s13, 0
      %p122 = por %p120, %p121
      %p123 = scmp.ne.s32.totalorder %s112, %s115
      %p124 = scmp.eq.s32.totalorder %s18, 1
      %p125 = por %p123, %p124
      %p126 = scmp.ne.s32.totalorder %s115, %s116
      %p127 = scmp.eq.s32.totalorder %s18, 0
      %p128 = por %p126, %p127
      %p129 = scmp.ne.s32.totalorder %s115, %s116
      %p130 = scmp.eq.s32.totalorder %s19, 1
      %p131 = por %p129, %p130
      %p133 = scmp.ne.s32.totalorder %s116, %s132
      %p134 = scmp.eq.s32.totalorder %s19, 0
      %p135 = por %p133, %p134
      %p136 = scmp.le.s32.totalorder 1, %s13
      %p137 = scmp.lt.s32.totalorder %s13, 3
      %p138 = pnand %p136, %p137
      %p139 = pneg %p138
      // Predicated region
      $region9: #{tpu_custom_call.1} parent=5 // pred_check
        _
      $region10: #{tpu_custom_call.1} parent=5 // pred_check_branch
        %141 = sbr.rel (%p138) target = $region12
      $region11: #{tpu_custom_call.1} parent=5 // pred_region
        %s142 = ssub.s32 %s13, 1
        // Predicated region
        $region13: #{tpu_custom_call.1} parent=11 // pred_check
          %p143 = pneg %p60
        $region14: #{tpu_custom_call.1} parent=11 // pred_check_branch
          %145 = sbr.rel (%p143) target = $region16
        $region15: #{tpu_custom_call.1} parent=11 // pred_region
          _
        $region16: #{tpu_custom_call.1} parent=11 // pred_fallthru
          _
        // Predicated region
        $region17: #{tpu_custom_call.1} parent=11 // pred_check
          %p146 = pneg %p81
        $region18: #{tpu_custom_call.1} parent=11 // pred_check_branch
          %148 = sbr.rel (%p146) target = $region20
        $region19: #{tpu_custom_call.1} parent=11 // pred_region
          _
        $region20: #{tpu_custom_call.1} parent=11 // pred_fallthru
          _
        // Predicated region
        $region21: #{tpu_custom_call.1} parent=11 // pred_check
          %p149 = pneg %p102
        $region22: #{tpu_custom_call.1} parent=11 // pred_check_branch
          %151 = sbr.rel (%p149) target = $region24
        $region23: #{tpu_custom_call.1} parent=11 // pred_region
          _
        $region24: #{tpu_custom_call.1} parent=11 // pred_fallthru
          _
      $region12: #{tpu_custom_call.1} parent=5 // pred_fallthru
        _
      %p152 = scmp.lt.s32.totalorder %s13, 2
      // Predicated region
      $region25: #{tpu_custom_call.1} parent=5 // pred_check
        %p153 = pneg %p152
      $region26: #{tpu_custom_call.1} parent=5 // pred_check_branch
        %155 = sbr.rel (%p153) target = $region28
      $region27: #{tpu_custom_call.1} parent=5 // pred_region
        // Predicated region
        $region29: #{tpu_custom_call.1} parent=27 // pred_check
          %p156 = pneg %p33
        $region30: #{tpu_custom_call.1} parent=27 // pred_check_branch
          %158 = sbr.rel (%p156) target = $region32
        $region31: #{tpu_custom_call.1} parent=27 // pred_region
          %p159 = scmp.lt.s32.totalorder %s13, 1
          %s160 = scalar_select %p159, %s13, 1
          %s161 = smul.addr %s160, 2
          %s162 = smul.addr %s161, 4
          %s163 = scalar_lea.vmem %s0, %s162
        $region32: #{tpu_custom_call.1} parent=27 // pred_fallthru
          _
      $region28: #{tpu_custom_call.1} parent=5 // pred_fallthru
        _
      %p164 = scmp.le.s32.totalorder 1, %s13
      %p165 = scmp.lt.s32.totalorder %s13, 3
      %p166 = pnand %p164, %p165
      %p167 = pneg %p166
      // Predicated region
      $region33: #{tpu_custom_call.1} parent=5 // pred_check
        _
      $region34: #{tpu_custom_call.1} parent=5 // pred_check_branch
        %169 = sbr.rel (%p166) target = $region36
      $region35: #{tpu_custom_call.1} parent=5 // pred_region
        %s170 = ssub.s32 %s13, 1
        %p171 = scmp.lt.s32.totalorder %s18, 1
        %s172 = scalar_select %p171, %s18, 1
        %s173 = smul.addr %s172, 2
        %s174 = smul.addr %s173, 4
        %s175 = scalar_lea.vmem %s0, %s174
        %p176 = pneg %p39
        %p177 = pneg %p36
        %p178 = pneg %p60
        %p179 = pneg %p57
        %p180 = pneg %p81
        %p181 = pneg %p78
        %p182 = pneg %p102
        %p183 = pneg %p99
        %p184 = pneg %p128
        %p185 = pneg %p125
        %s186 = sand.u32 %s115, 1
        %s187 = scalar_lea.sflag [#allocation3], %s186
        %s188 = sand.u32 %s115, 1
        %s189 = smul.addr %s188, 16
        %s190 = scalar_lea.vmem [#allocation2], %s189
        %p191 = scmp.lt.s32.totalorder %s18, 1
        %s192 = scalar_select %p191, %s18, 1
        %s193 = smul.addr %s192, 2
        %s194 = smul.addr %s193, 4
        %s195 = scalar_lea.vmem %s0, %s194
        %v197 = vld [vmem:[%s195] sm:$0xf]
        %v198 = vld [vmem:[%s195 + $0x4] sm:$0xf]
        %v199 = vld [vmem:[%s1] sm:$0xf]
        %v200 = vld [vmem:[%s1 + $0x4] sm:$0xf]
        %v201 = vld [vmem:[%s1 + $0x8] sm:$0xf]
        %v202 = vld [vmem:[%s1 + $0xc] sm:$0xf]
        %v203 = vld [vmem:[%s1 + $0x10] sm:$0xf]
        %v204 = vld [vmem:[%s1 + $0x14] sm:$0xf]
        %v205 = vld [vmem:[%s2] sm:$0x1]
        %v207 = vlaneseq
        %v208 = vshrl.u32 %v207, 7
        %v209 = vsub.s32 0, %v208
        %v210 = vrot.slane %v205, %v209
        %v214 = vunpack.c.l.b16 %v197
        %v215 = vunpack.c.l.b16 %v198
        %v216 = vpack.c.b16 %v215, %v214
        %v223 = vunpack.c.l.b16 %v199
        %v224 = vunpack.c.l.b16 %v200
        %v225 = vunpack.c.l.b16 %v201
        %v226 = vunpack.c.l.b16 %v202
        %v227 = vunpack.c.l.b16 %v203
        %v228 = vunpack.c.l.b16 %v204
        %v229 = vpack.c.b16 %v224, %v223
        %v230 = vpack.c.b16 %v226, %v225
        %v231 = vpack.c.b16 %v228, %v227
        %vm235 = vcmask 392192
        %v237 = vsel %vm235, %v216, 0
        %239 = vmatprep.subr.bf16.mxu0 0
        %240 = vmatpush1.bf16.msra.mxu0 %v229
        %241 = vmatprep.subr.bf16.mxu0 0
        %242 = vmatpush1.bf16.msra.mxu0 %v230
        %243 = vmatprep.subr.bf16.mxu0 0
        %244 = vmatpush1.bf16.msra.mxu0 %v231
        %245 = vmatprep.subr.bf16.mxu0 0
        %246 = vmatpush1.bf16.msra.mxu0 0
        %247 = vmatprep.subr.bf16.mxu0 0
        %248 = vmatpush1.bf16.msra.mxu0 0
        %249 = vmatprep.subr.bf16.mxu0 0
        %250 = vmatpush1.bf16.msra.mxu0 0
        %251 = vmatprep.subr.bf16.mxu0 0
        %252 = vmatpush1.bf16.msra.mxu0 0
        %253 = vmatprep.subr.bf16.mxu0 0
        %254 = vmatpush1.bf16.msra.mxu0 0
        %255 = vmatprep.subr.bf16.mxu0 0
        %256 = vmatpush1.bf16.msra.mxu0 0
        %257 = vmatprep.subr.bf16.mxu0 0
        %258 = vmatpush1.bf16.msra.mxu0 0
        %259 = vmatprep.subr.bf16.mxu0 0
        %260 = vmatpush1.bf16.msra.mxu0 0
        %261 = vmatprep.subr.bf16.mxu0 0
        %262 = vmatpush1.bf16.msra.mxu0 0
        %263 = vmatprep.subr.bf16.mxu0 0
        %264 = vmatpush1.bf16.msra.mxu0 0
        %265 = vmatprep.subr.bf16.mxu0 0
        %266 = vmatpush1.bf16.msra.mxu0 0
        %267 = vmatprep.subr.bf16.mxu0 0
        %268 = vmatpush1.bf16.msra.mxu0 0
        %269 = vmatprep.subr.bf16.mxu0 0
        %270 = vmatpush1.bf16.msra.mxu0 0
        %271 = vmatprep.mubr.bf16.mxu0 0
        %272 = vmatmul.mubr.bf16.gmra.mrb[0].mxu0 %v237
        %v273 = vpop.f32.mrb[0].mxu0
        %v274 = vadd.f32 %v210, %v273
        %v275 = vpop.f32.mrb[0].mxu0
        %v276 = vpop.f32.mrb[0].mxu0
        %v277 = vadd.f32 %v210, %v276
        %v278 = vpop.f32.mrb[0].mxu0
        %279 = vdwg.mxu0
        %v280 = vld [vmem:[%s3] sm:$0xff]
        %v281 = vld [vmem:[%s3 + $0x8] sm:$0xff]
        %v282 = vadd.f32 %v274, %v280
        %v283 = vadd.f32 %v277, %v281
        %vm284 = vcmask 261120
        %285 = vst.msk [vmem:[%s190] sm:$0xff] %vm284, %v282
        %286 = vst.msk [vmem:[%s190 + $0x8] sm:$0xff] %vm284, %v283
        %s287 = sand.u32 %s115, 1
        %s288 = scalar_lea.sflag [#allocation3], %s287
        %s289 = sand.u32 %s115, 1
        %s290 = smul.addr %s289, 16
        %s291 = scalar_lea.vmem [#allocation2], %s290
        // Predicated region
        $region37: #{tpu_custom_call.1} parent=35 // pred_check
          %p292 = pneg %p125
        $region38: #{tpu_custom_call.1} parent=35 // pred_check_branch
          %294 = sbr.rel (%p292) target = $region40
        $region39: #{tpu_custom_call.1} parent=35 // pred_region
          %s296 = ssub.s32 256, 256
          %297 = vsyncadd %s288, %s296
          %s298 = smul.addr %s18, 2
          %s299 = smul.addr %s298, 128
          %s300 = scalar_lea.hbm %s4, %s299
          %s301 = sshll.u32 %s291, 4
          %s302 = int_to_ptr.vmem [resolvable:$true] %s301
          %307 = dma.vmem_to_hbm [thread:$0]  %s302, 256, %s300, %s288, 128, 128, 8
        $region40: #{tpu_custom_call.1} parent=35 // pred_fallthru
          _
      $region36: #{tpu_custom_call.1} parent=5 // pred_fallthru
        _
      %p308 = scmp.le.s32.totalorder 2, %s13
      // Predicated region
      $region41: #{tpu_custom_call.1} parent=5 // pred_check
        %p309 = pneg %p308
      $region42: #{tpu_custom_call.1} parent=5 // pred_check_branch
        %311 = sbr.rel (%p309) target = $region44
      $region43: #{tpu_custom_call.1} parent=5 // pred_region
        %s312 = ssub.s32 %s13, 2
        // Predicated region
        $region45: #{tpu_custom_call.1} parent=43 // pred_check
          %p313 = pneg %p131
        $region46: #{tpu_custom_call.1} parent=43 // pred_check_branch
          %315 = sbr.rel (%p313) target = $region48
        $region47: #{tpu_custom_call.1} parent=43 // pred_region
          %s316 = sand.u32 %s116, 1
          %s317 = scalar_lea.sflag [#allocation3], %s316
          %s318 = sand.u32 %s116, 1
          %s319 = smul.addr %s318, 16
          %s320 = scalar_lea.vmem [#allocation2], %s319
          %321 = dma.done %s317, 256
        $region48: #{tpu_custom_call.1} parent=43 // pred_fallthru
          _
      $region44: #{tpu_custom_call.1} parent=5 // pred_fallthru
        _
    $region6: #{tpu_custom_call.1} parent=1 // loop_footer
      %s17 = sadd.s32 1, %s13
    $region7: #{tpu_custom_call.1} parent=1 // loop_footer_branch
      %12 = sbr.rel target = $region3
    $region8: #{tpu_custom_call.1} parent=1 // loop_exit
      _
    %322 = vsyncpa [#allocation3], 1
    %s323 = scalar_lea.sflag [#allocation3], 1
    %324 = vsyncpa %s323, 1

</llo_original>
